<compile_context>
chip_gen: v6e
topology: v6e:2x2x1
jax: 0.10.0
libtpu: 0.0.40
codegen_flags: <defaults>
</compile_context>

<pallas_src>
import functools

import jax
import jax.numpy as jnp
from jax import lax
from jax.experimental import pallas as pl
from jax.experimental.pallas import tpu as pltpu


def _nonlocal_kernel(x_ref, wqkv_ref, wmask_ref, o_ref,
                     phi_ref, theta_ref, g_ref, acc_ref,
                     *, ch: int, block_n: int):
    j = pl.program_id(1)
    nj = pl.num_programs(1)

    # --- init (once per batch): fused projections + zero accumulator -------
    @pl.when(j == 0)
    def _init():
        x_bf = x_ref[0].astype(jnp.bfloat16)                          # (C, N)
        proj = jnp.dot(wqkv_ref[...], x_bf,
                       preferred_element_type=jnp.float32)            # (3Ch, N)
        proj = proj.astype(jnp.bfloat16)
        phi_ref[...] = proj[0:ch, :]
        theta_ref[...] = proj[ch:2 * ch, :]
        g_ref[...] = proj[2 * ch:3 * ch, :]
        acc_ref[...] = jnp.zeros_like(acc_ref)

    # --- per key-tile work ---------------------------------------------------
    col0 = pl.multiple_of(j * block_n, block_n)
    phi_j = phi_ref[:, pl.ds(col0, block_n)]                          # (Ch, tj)
    theta = theta_ref[...]                                            # (Ch, N)

    # st[jj, i] = sum_c phi[c, j0+jj] * theta[c, i]  == S[i, j]^T
    # (contract channel axes directly; no .T materialized)
    st = lax.dot_general(phi_j, theta,
                         dimension_numbers=(((0,), (0,)), ((), ())),
                         preferred_element_type=jnp.float32)          # (tj, N)

    # torch Softmax(dim=1) on (B,N,N) -> normalize over i == lane axis of st.
    m = jnp.max(st, axis=-1, keepdims=True)
    e = jnp.exp(st - m)
    denom = jnp.sum(e, axis=-1, keepdims=True)
    at = (e * pl.reciprocal(denom, approx=True)).astype(jnp.bfloat16)  # (tj, N)

    # attn_g[h, i] += sum_jj g[h, j0+jj] * A^T[jj, i]
    g_j = g_ref[:, pl.ds(col0, block_n)]                              # (Ch, tj)
    acc_ref[...] += jnp.dot(g_j, at, preferred_element_type=jnp.float32)

    # --- finalize (last key tile): mask conv + residual ----------------------
    @pl.when(j == nj - 1)
    def _finalize():
        mask = jnp.dot(wmask_ref[...], acc_ref[...].astype(jnp.bfloat16),
                       preferred_element_type=jnp.float32)            # (C, N)
        o_ref[0] = (mask + x_ref[0].astype(jnp.float32)).astype(o_ref.dtype)


def _pick_block_n(n: int, want: int) -> int:
    """Largest divisor of n that is <= want, preferring multiples of 128."""
    want = max(1, min(want, n))
    start = want - want % 128
    for cand in range(start, 0, -128):
        if n % cand == 0:
            return cand
    for cand in range(want, 0, -1):
        if n % cand == 0:
            return cand
    return n


def nonlocal_block(x, w_phi, w_theta, w_g, w_mask, *, block_n=512,
                   score_vmem_budget=24 * 1024 * 1024):
    """x: (B, C, H, W). w_phi/w_theta/w_g: (Ch, C); w_mask: (C, Ch)."""
    B, C, H, W = x.shape
    N = H * W
    Ch = w_phi.shape[0]

    # Cap the key-tile size so the (bn, N) score/exp/prob intermediates
    # (~12 bytes/elem: f32 scores + f32 exp + bf16 probs) fit the VMEM budget.
    cap = max(128, score_vmem_budget // (12 * N))
    bn = _pick_block_n(N, min(block_n, cap))
    nj = N // bn

    # Fuse the three projection weights; cast matmul operands to bf16.
    w_qkv = jnp.concatenate([w_phi, w_theta, w_g], axis=0).astype(jnp.bfloat16)
    w_mask_bf = w_mask.astype(jnp.bfloat16)
    x_flat = x.reshape(B, C, N)

    kernel = functools.partial(_nonlocal_kernel, ch=Ch, block_n=bn)

    itemsize = jnp.dtype(x.dtype).itemsize
    flops = B * (2 * 3 * Ch * C * N + 4 * Ch * N * N + 2 * C * Ch * N)
    cost = pl.CostEstimate(
        flops=int(flops),
        transcendentals=int(B * N * N),
        bytes_accessed=int(2 * B * C * N * itemsize + (3 * Ch * C + C * Ch) * 2),
    )

    vmem_est = (
        4 * C * N * itemsize                 # x + out blocks, double-buffered
        + (3 * Ch * C + C * Ch) * 2 * 2      # bf16 weights, double-buffered
        + 3 * Ch * N * 2 + Ch * N * 4        # proj scratch (bf16) + acc (f32)
        + bn * N * 12                        # score / exp / prob intermediates
        + (1 << 20)                          # slack
    )
    # 64 MiB cap keeps the request valid on v7x (64 MiB physical VMEM) too.
    vmem_limit = int(min(max(vmem_est, 32 * 1024 * 1024), 64 * 1024 * 1024))

    out_flat = pl.pallas_call(
        kernel,
        out_shape=jax.ShapeDtypeStruct((B, C, N), x.dtype),
        grid_spec=pltpu.PrefetchScalarGridSpec(
            num_scalar_prefetch=0,
            grid=(B, nj),
            in_specs=[
                pl.BlockSpec((1, C, N), lambda b, j: (b, 0, 0)),
                pl.BlockSpec((3 * Ch, C), lambda b, j: (0, 0)),
                pl.BlockSpec((C, Ch), lambda b, j: (0, 0)),
            ],
            out_specs=pl.BlockSpec((1, C, N), lambda b, j: (b, 0, 0)),
            scratch_shapes=[
                pltpu.VMEM((Ch, N), jnp.bfloat16),   # phi
                pltpu.VMEM((Ch, N), jnp.bfloat16),   # theta
                pltpu.VMEM((Ch, N), jnp.bfloat16),   # g
                pltpu.VMEM((Ch, N), jnp.float32),    # attn_g accumulator
            ],
        ),
        compiler_params=pltpu.CompilerParams(
            dimension_semantics=("parallel", "arbitrary"),
            vmem_limit_bytes=vmem_limit,
        ),
        cost_estimate=cost,
    )(x_flat, w_qkv, w_mask_bf)

    return out_flat.reshape(B, C, H, W)


def nonlocal_block_ref(x, w_phi, w_theta, w_g, w_mask):
    """Pure-JAX (f32) reference mirroring the PyTorch forward exactly."""
    B, C, H, W = x.shape
    N = H * W
    xf = x.reshape(B, C, N)
    phi = jnp.einsum("hc,bcn->bhn", w_phi, xf)
    theta = jnp.einsum("hc,bcn->bhn", w_theta, xf)
    g = jnp.einsum("hc,bcn->bhn", w_g, xf)
    attn = jnp.einsum("bhn,bhm->bnm", theta, phi)            # (B, N, N)
    attn = jax.nn.softmax(attn, axis=1)                      # torch dim=1
    attn_g = jnp.einsum("bnm,bmh->bnh", attn, jnp.swapaxes(g, 1, 2))
    attn_g = jnp.swapaxes(attn_g, 1, 2)                      # (B, Ch, N)
    mask = jnp.einsum("ch,bhn->bcn", w_mask, attn_g)
    return (mask + xf).reshape(B, C, H, W)


if __name__ == "__main__":
    B, C, H, W = 2, 4, 16, 16
    Ch = C // 2

    key = jax.random.PRNGKey(0)
    kx, k1, k2, k3, k4 = jax.random.split(key, 5)
    x = jax.random.normal(kx, (B, C, H, W), dtype=jnp.float32)

    # Conv2d(kernel_size=1, bias=False) weights: (out, in, 1, 1) -> (out, in).
    bound1 = 1.0 / jnp.sqrt(jnp.float32(C))
    bound2 = 1.0 / jnp.sqrt(jnp.float32(Ch))
    w_phi = jax.random.uniform(k1, (Ch, C), jnp.float32, -bound1, bound1)
    w_theta = jax.random.uniform(k2, (Ch, C), jnp.float32, -bound1, bound1)
    w_g = jax.random.uniform(k3, (Ch, C), jnp.float32, -bound1, bound1)
    w_mask = jax.random.uniform(k4, (C, Ch), jnp.float32, -bound2, bound2)

    # block_n=128 -> two key tiles at N=256, exercising the accumulation path.
    out = nonlocal_block(x, w_phi, w_theta, w_g, w_mask, block_n=128)
    out = jax.block_until_ready(out)

    ref = nonlocal_block_ref(x, w_phi, w_theta, w_g, w_mask)
    assert out.shape == (B, C, H, W)
    # bf16 MXU operands -> relaxed tolerance vs the f32 reference.
    assert jnp.allclose(out, ref, atol=2e-2, rtol=2e-2), "mismatch vs reference"

    print("KERNEL_OK")
</pallas_src>

<mosaic_0001>
module attributes {stable_mosaic.version = 11 : i64} {
  func.func @_nonlocal_kernel(%arg0: i32, %arg1: i32, %arg2: memref<1x4x256xf32, #tpu.memory_space<vmem>>, %arg3: memref<6x4xbf16, #tpu.memory_space<vmem>>, %arg4: memref<4x2xbf16, #tpu.memory_space<vmem>>, %arg5: memref<1x4x256xf32, #tpu.memory_space<vmem>>, %arg6: memref<2x256xbf16, #tpu.memory_space<vmem>>, %arg7: memref<2x256xbf16, #tpu.memory_space<vmem>>, %arg8: memref<2x256xbf16, #tpu.memory_space<vmem>>, %arg9: memref<2x256xf32, #tpu.memory_space<vmem>>) attributes {dimension_semantics = [#tpu.dimension_semantics<parallel>, #tpu.dimension_semantics<arbitrary>], iteration_bounds = array<i64: 2, 2>, scalar_prefetch = 0 : i64, scratch_operands = 4 : i64, tpu.core_type = #tpu.core_type<tc>, window_params = [{transform_indices = @transform_0, window_bounds = array<i64: 1, 4, 256>}, {pipeline_mode = #tpu.pipeline_mode<synchronous>, transform_indices = @transform_1, window_bounds = array<i64: 6, 4>}, {pipeline_mode = #tpu.pipeline_mode<synchronous>, transform_indices = @transform_2, window_bounds = array<i64: 4, 2>}, {transform_indices = @transform_3, window_bounds = array<i64: 1, 4, 256>}]} {
    %c0_i32 = arith.constant 0 : i32
    %0 = arith.cmpi eq, %arg1, %c0_i32 : i32
    %1 = arith.extui %0 : i1 to i32
    %c0_i32_0 = arith.constant 0 : i32
    %2 = arith.cmpi ne, %1, %c0_i32_0 : i32
    scf.if %2 {
      %c0_12 = arith.constant 0 : index
      %c0_13 = arith.constant 0 : index
      %c0_14 = arith.constant 0 : index
      %29 = vector.load %arg2[%c0_12, %c0_13, %c0_14] : memref<1x4x256xf32, #tpu.memory_space<vmem>>, vector<1x4x256xf32>
      %30 = vector.shape_cast %29 : vector<1x4x256xf32> to vector<4x256xf32>
      %31 = arith.truncf %30 : vector<4x256xf32> to vector<4x256xbf16>
      %c0_15 = arith.constant 0 : index
      %c0_16 = arith.constant 0 : index
      %32 = vector.load %arg3[%c0_15, %c0_16] : memref<6x4xbf16, #tpu.memory_space<vmem>>, vector<6x4xbf16>
      %cst_17 = arith.constant dense<0.000000e+00> : vector<6x256xf32>
      %33 = tpu.matmul %32, %31, %cst_17 {dimension_numbers = #tpu.dot_dimension_numbers<[1], [0], [0], [1], [0, 0, 1, 1], [], []>} : vector<6x4xbf16>, vector<4x256xbf16>, vector<6x256xf32> -> vector<6x256xf32>
      %34 = arith.truncf %33 : vector<6x256xf32> to vector<6x256xbf16>
      %35 = vector.extract_strided_slice %34 {offsets = [0, 0], sizes = [2, 256], strides = [1, 1]} : vector<6x256xbf16> to vector<2x256xbf16>
      %c0_18 = arith.constant 0 : index
      %c0_19 = arith.constant 0 : index
      %36 = vector.load %arg6[%c0_18, %c0_19] : memref<2x256xbf16, #tpu.memory_space<vmem>>, vector<2x256xbf16>
      tpu.vector_store %arg6[%c0_18, %c0_19], %35 {strides = array<i32>} : memref<2x256xbf16, #tpu.memory_space<vmem>>, vector<2x256xbf16>,
      %37 = vector.extract_strided_slice %34 {offsets = [2, 0], sizes = [2, 256], strides = [1, 1]} : vector<6x256xbf16> to vector<2x256xbf16>
      %c0_20 = arith.constant 0 : index
      %c0_21 = arith.constant 0 : index
      %38 = vector.load %arg7[%c0_20, %c0_21] : memref<2x256xbf16, #tpu.memory_space<vmem>>, vector<2x256xbf16>
      tpu.vector_store %arg7[%c0_20, %c0_21], %37 {strides = array<i32>} : memref<2x256xbf16, #tpu.memory_space<vmem>>, vector<2x256xbf16>,
      %39 = vector.extract_strided_slice %34 {offsets = [4, 0], sizes = [2, 256], strides = [1, 1]} : vector<6x256xbf16> to vector<2x256xbf16>
      %c0_22 = arith.constant 0 : index
      %c0_23 = arith.constant 0 : index
      %40 = vector.load %arg8[%c0_22, %c0_23] : memref<2x256xbf16, #tpu.memory_space<vmem>>, vector<2x256xbf16>
      tpu.vector_store %arg8[%c0_22, %c0_23], %39 {strides = array<i32>} : memref<2x256xbf16, #tpu.memory_space<vmem>>, vector<2x256xbf16>,
      %cst_24 = arith.constant 0.000000e+00 : f32
      %41 = vector.broadcast %cst_24 : f32 to vector<2x256xf32>
      %c0_25 = arith.constant 0 : index
      %c0_26 = arith.constant 0 : index
      %42 = vector.load %arg9[%c0_25, %c0_26] : memref<2x256xf32, #tpu.memory_space<vmem>>, vector<2x256xf32>
      tpu.vector_store %arg9[%c0_25, %c0_26], %41 {strides = array<i32>} : memref<2x256xf32, #tpu.memory_space<vmem>>, vector<2x256xf32>,
    } else {
    }
    %c128_i32 = arith.constant 128 : i32
    %3 = arith.muli %arg1, %c128_i32 : i32
    %4 = tpu.assume_multiple %3, 128 : i32
    %c0 = arith.constant 0 : index
    %5 = arith.index_cast %4 : i32 to index
    %6 = vector.load %arg6[%c0, %5] : memref<2x256xbf16, #tpu.memory_space<vmem>>, vector<2x128xbf16>
    %c0_1 = arith.constant 0 : index
    %c0_2 = arith.constant 0 : index
    %7 = vector.load %arg7[%c0_1, %c0_2] : memref<2x256xbf16, #tpu.memory_space<vmem>>, vector<2x256xbf16>
    %cst = arith.constant dense<0.000000e+00> : vector<128x256xf32>
    %8 = tpu.matmul %6, %7, %cst {dimension_numbers = #tpu.dot_dimension_numbers<[0], [0], [1], [1], [0, 1, 1, 1], [], []>} : vector<2x128xbf16>, vector<2x256xbf16>, vector<128x256xf32> -> vector<128x256xf32>
    %cst_3 = arith.constant dense<0xFF800000> : vector<128xf32>
    %9 = vector.multi_reduction <maximumf>, %8, %cst_3 [1] : vector<128x256xf32> to vector<128xf32>
    %10 = vector.shape_cast %9 : vector<128xf32> to vector<128x1xf32>
    %11 = vector.broadcast %10 : vector<128x1xf32> to vector<128x256xf32>
    %12 = arith.subf %8, %11 : vector<128x256xf32>
    %13 = math.exp %12 : vector<128x256xf32>
    %cst_4 = arith.constant dense<0.000000e+00> : vector<128xf32>
    %14 = vector.multi_reduction <add>, %13, %cst_4 [1] : vector<128x256xf32> to vector<128xf32>
    %15 = vector.shape_cast %14 : vector<128xf32> to vector<128x1xf32>
    %16 = tpu.reciprocal %15 {approx = true} : vector<128x1xf32> -> vector<128x1xf32>
    %17 = vector.broadcast %16 : vector<128x1xf32> to vector<128x256xf32>
    %18 = arith.mulf %13, %17 : vector<128x256xf32>
    %19 = arith.truncf %18 : vector<128x256xf32> to vector<128x256xbf16>
    %c0_5 = arith.constant 0 : index
    %20 = arith.index_cast %4 : i32 to index
    %21 = vector.load %arg8[%c0_5, %20] : memref<2x256xbf16, #tpu.memory_space<vmem>>, vector<2x128xbf16>
    %c0_6 = arith.constant 0 : index
    %c0_7 = arith.constant 0 : index
    %22 = vector.load %arg9[%c0_6, %c0_7] : memref<2x256xf32, #tpu.memory_space<vmem>>, vector<2x256xf32>
    %cst_8 = arith.constant dense<0.000000e+00> : vector<2x256xf32>
    %23 = tpu.matmul %21, %19, %cst_8 {dimension_numbers = #tpu.dot_dimension_numbers<[1], [0], [0], [1], [0, 0, 1, 1], [], []>} : vector<2x128xbf16>, vector<128x256xbf16>, vector<2x256xf32> -> vector<2x256xf32>
    %24 = arith.addf %22, %23 : vector<2x256xf32>
    %c0_9 = arith.constant 0 : index
    %c0_10 = arith.constant 0 : index
    %25 = vector.load %arg9[%c0_9, %c0_10] : memref<2x256xf32, #tpu.memory_space<vmem>>, vector<2x256xf32>
    tpu.vector_store %arg9[%c0_9, %c0_10], %24 {strides = array<i32>} : memref<2x256xf32, #tpu.memory_space<vmem>>, vector<2x256xf32>,
    %c1_i32 = arith.constant 1 : i32
    %26 = arith.cmpi eq, %arg1, %c1_i32 : i32
    %27 = arith.extui %26 : i1 to i32
    %c0_i32_11 = arith.constant 0 : i32
    %28 = arith.cmpi ne, %27, %c0_i32_11 : i32
    scf.if %28 {
      %c0_12 = arith.constant 0 : index
      %c0_13 = arith.constant 0 : index
      %29 = vector.load %arg4[%c0_12, %c0_13] : memref<4x2xbf16, #tpu.memory_space<vmem>>, vector<4x2xbf16>
      %c0_14 = arith.constant 0 : index
      %c0_15 = arith.constant 0 : index
      %30 = vector.load %arg9[%c0_14, %c0_15] : memref<2x256xf32, #tpu.memory_space<vmem>>, vector<2x256xf32>
      %31 = arith.truncf %30 : vector<2x256xf32> to vector<2x256xbf16>
      %cst_16 = arith.constant dense<0.000000e+00> : vector<4x256xf32>
      %32 = tpu.matmul %29, %31, %cst_16 {dimension_numbers = #tpu.dot_dimension_numbers<[1], [0], [0], [1], [0, 0, 1, 1], [], []>} : vector<4x2xbf16>, vector<2x256xbf16>, vector<4x256xf32> -> vector<4x256xf32>
      %c0_17 = arith.constant 0 : index
      %c0_18 = arith.constant 0 : index
      %c0_19 = arith.constant 0 : index
      %33 = vector.load %arg2[%c0_17, %c0_18, %c0_19] : memref<1x4x256xf32, #tpu.memory_space<vmem>>, vector<1x4x256xf32>
      %34 = vector.shape_cast %33 : vector<1x4x256xf32> to vector<4x256xf32>
      %35 = arith.addf %32, %34 : vector<4x256xf32>
      %c0_20 = arith.constant 0 : index
      %c0_21 = arith.constant 0 : index
      %c0_22 = arith.constant 0 : index
      %36 = vector.load %arg5[%c0_20, %c0_21, %c0_22] : memref<1x4x256xf32, #tpu.memory_space<vmem>>, vector<1x4x256xf32>
      %37 = vector.shape_cast %36 : vector<1x4x256xf32> to vector<4x256xf32>
      %38 = vector.shape_cast %35 : vector<4x256xf32> to vector<1x4x256xf32>
      tpu.vector_store %arg5[%c0_20, %c0_21, %c0_22], %38 {strides = array<i32>} : memref<1x4x256xf32, #tpu.memory_space<vmem>>, vector<1x4x256xf32>,
    } else {
    }
    return
  }
  func.func @transform_0(%arg0: i32, %arg1: i32) -> (i32, i32, i32) {
    %c0_i32 = arith.constant 0 : i32
    %c0_i32_0 = arith.constant 0 : i32
    %c0_i32_1 = arith.constant 0 : i32
    return %arg0, %c0_i32, %c0_i32_0 : i32, i32, i32
  }
  func.func @transform_1(%arg0: i32, %arg1: i32) -> (i32, i32) {
    %c0_i32 = arith.constant 0 : i32
    %c0_i32_0 = arith.constant 0 : i32
    %c0_i32_1 = arith.constant 0 : i32
    return %c0_i32, %c0_i32_0 : i32, i32
  }
  func.func @transform_2(%arg0: i32, %arg1: i32) -> (i32, i32) {
    %c0_i32 = arith.constant 0 : i32
    %c0_i32_0 = arith.constant 0 : i32
    %c0_i32_1 = arith.constant 0 : i32
    return %c0_i32, %c0_i32_0 : i32, i32
  }
  func.func @transform_3(%arg0: i32, %arg1: i32) -> (i32, i32, i32) {
    %c0_i32 = arith.constant 0 : i32
    %c0_i32_0 = arith.constant 0 : i32
    %c0_i32_1 = arith.constant 0 : i32
    return %arg0, %c0_i32, %c0_i32_0 : i32, i32, i32
  }
}

</mosaic_0001>

<llo_original>
// kernel: tpu_custom_call.1
$region0: #{tpu_custom_call.1}
  #allocation0 [shape = 'u32[]', space=smem, size = 0x4, offset = 0x4, fixed_abs, tag = 'smem constant byte address 0x4 - core index']
  #allocation1 [shape = 'u32[144,128]{1,0:T(1,128)}', space=vmem, size = 0x12000, scoped, tag = 'internal scratch']
  #allocation2 [shape = 'bf16[2,256]{1,0:T(2,128)(2,1)}', space=vmem, size = 0x400, scoped, tag = 'scratch operand']
  #allocation3 [shape = 'bf16[2,256]{1,0:T(2,128)(2,1)}', space=vmem, size = 0x400, scoped, tag = 'scratch operand']
  #allocation4 [shape = 'bf16[2,256]{1,0:T(2,128)(2,1)}', space=vmem, size = 0x400, scoped, tag = 'scratch operand']
  #allocation5 [shape = 'f32[2,256]{1,0:T(2,128)}', space=vmem, size = 0x800, scoped, tag = 'scratch operand']
  %s0 = inlined_call_operand.hbm [shape: f32[2,4,256], index: 0, kind: input, shape index: {}]
  %s1 = inlined_call_operand.vmem [shape: bf16[6,4], index: 1, kind: input, shape index: {}]
  %s2 = inlined_call_operand.vmem [shape: bf16[4,2], index: 2, kind: input, shape index: {}]
  %s3 = inlined_call_operand.hbm [shape: f32[2,4,256], index: 3, kind: output, shape index: {}]
  %s4 = sld [smem:[#allocation0]]
  $region57: #{tpu_custom_call.1} parent=0
    _
  %s6 = ssub.s32 1, %s4
  %s7 = scalar_select 0, %s6, %s4
  $region1: #{tpu_custom_call.1} parent=0
    #allocation6 [shape = 'u8[8192]{0}', space=vmem, size = 0x2000, scoped, tag = 'input window, operand 0']
    #allocation7 [shape = 's32[2]{0}', space=sflag, size = 0x8, scoped, tag = 'scoped memory for tpu_custom_call.1']
    #allocation8 [shape = 's32[2]{0}', space=sflag, size = 0x8, scoped, tag = 'scoped memory for tpu_custom_call.1']
    #allocation9 [shape = 'u8[8192]{0}', space=vmem, size = 0x2000, scoped, tag = 'output window, operand 0']
    %8 = vsyncpa [#allocation7], 0
    %s9 = scalar_lea.sflag [#allocation7], 1
    %10 = vsyncpa %s9, 0
    %11 = vsyncpa [#allocation8], 0
    %s12 = scalar_lea.sflag [#allocation8], 1
    %13 = vsyncpa %s12, 0
    loop: start=0, step=1, limit=6
    $region2: #{tpu_custom_call.1} parent=1 // loop_pre_header
      _
    $region3: #{tpu_custom_call.1} parent=1 // loop_header
      %s15 = sphi 0, %s19
      %p16 = scmp.ge.s32.totalorder %s15, 6
      %s22 = sphi 0, %s34
      %s23 = sphi 0, %s30
      %s24 = sphi 0, %s22
      %s25 = sphi 0, %s23
      %s26 = sphi 0, %s24
      %s27 = sphi 0, %s25
      %s37 = sphi 0, %s39
      %s40 = sphi 0, %s37
      %s41 = sphi 0, %s40
      %s57 = sphi 0, %s41
      %s61 = sphi 0, %s61
      %s63 = sphi 0, %s61
      %s64 = sphi 0, %s63
      %s78 = sphi 0, %s64
      %s82 = sphi 0, %s82
      %s84 = sphi 0, %s82
      %s85 = sphi 0, %s84
      %s99 = sphi 0, %s85
      %s105 = sphi 0, %s107
      %s108 = sphi 0, %s105
      %s109 = sphi 0, %s108
      %s125 = sphi 0, %s109
    $region4: #{tpu_custom_call.1} parent=1 // loop_header_branch
      %18 = sbr.rel (%p16) target = $region8
    $region5: #{tpu_custom_call.1} parent=1 // loop_body
      %s20 = ssub.s32 %s15, 1
      %s21 = ssub.s32 %s15, 2
      %s28 = sadd.s32 1, %s23
      %p29 = scmp.ge.s32.totalorder %s28, 2
      %s30 = scalar_select %p29, 0, %s28
      %s31 = sadd.s32 1, %s22
      %s32 = scalar_select %p29, %s31, %s22
      %p33 = scmp.ge.s32.totalorder %s32, 2
      %s34 = scalar_select %p33, 0, %s32
      %s35 = ssub.s32 %s22, %s34
      %p36 = scmp.eq.s32.totalorder %s35, 0
      %s38 = sadd.s32 %s37, 1
      %s39 = scalar_select %p36, %s37, %s38
      %p42 = pneg %p36
      %p43 = scmp.eq.s32.totalorder %s15, 3
      %p44 = por %p42, %p43
      %p45 = scmp.ne.s32.totalorder %s37, %s40
      %p46 = scmp.eq.s32.totalorder %s15, 0
      %p47 = por %p45, %p46
      %p48 = scmp.ne.s32.totalorder %s37, %s40
      %p49 = scmp.eq.s32.totalorder %s20, 3
      %p50 = por %p48, %p49
      %p51 = scmp.ne.s32.totalorder %s40, %s41
      %p52 = scmp.eq.s32.totalorder %s20, 0
      %p53 = por %p51, %p52
      %p54 = scmp.ne.s32.totalorder %s40, %s41
      %p55 = scmp.eq.s32.totalorder %s21, 3
      %p56 = por %p54, %p55
      %p58 = scmp.ne.s32.totalorder %s41, %s57
      %p59 = scmp.eq.s32.totalorder %s21, 0
      %p60 = por %p58, %p59
      %s62 = sadd.s32 %s61, 1
      %p65 = scmp.eq.s32.totalorder %s15, 3
      %p66 = scmp.ne.s32.totalorder %s61, %s63
      %p67 = scmp.eq.s32.totalorder %s15, 0
      %p68 = por %p66, %p67
      %p69 = scmp.ne.s32.totalorder %s61, %s63
      %p70 = scmp.eq.s32.totalorder %s20, 3
      %p71 = por %p69, %p70
      %p72 = scmp.ne.s32.totalorder %s63, %s64
      %p73 = scmp.eq.s32.totalorder %s20, 0
      %p74 = por %p72, %p73
      %p75 = scmp.ne.s32.totalorder %s63, %s64
      %p76 = scmp.eq.s32.totalorder %s21, 3
      %p77 = por %p75, %p76
      %p79 = scmp.ne.s32.totalorder %s64, %s78
      %p80 = scmp.eq.s32.totalorder %s21, 0
      %p81 = por %p79, %p80
      %s83 = sadd.s32 %s82, 1
      %p86 = scmp.eq.s32.totalorder %s15, 3
      %p87 = scmp.ne.s32.totalorder %s82, %s84
      %p88 = scmp.eq.s32.totalorder %s15, 0
      %p89 = por %p87, %p88
      %p90 = scmp.ne.s32.totalorder %s82, %s84
      %p91 = scmp.eq.s32.totalorder %s20, 3
      %p92 = por %p90, %p91
      %p93 = scmp.ne.s32.totalorder %s84, %s85
      %p94 = scmp.eq.s32.totalorder %s20, 0
      %p95 = por %p93, %p94
      %p96 = scmp.ne.s32.totalorder %s84, %s85
      %p97 = scmp.eq.s32.totalorder %s21, 3
      %p98 = por %p96, %p97
      %p100 = scmp.ne.s32.totalorder %s85, %s99
      %p101 = scmp.eq.s32.totalorder %s21, 0
      %p102 = por %p100, %p101
      %s103 = ssub.s32 %s22, %s34
      %p104 = scmp.eq.s32.totalorder %s103, 0
      %s106 = sadd.s32 %s105, 1
      %s107 = scalar_select %p104, %s105, %s106
      %p110 = pneg %p104
      %p111 = scmp.eq.s32.totalorder %s15, 3
      %p112 = por %p110, %p111
      %p113 = scmp.ne.s32.totalorder %s105, %s108
      %p114 = scmp.eq.s32.totalorder %s15, 0
      %p115 = por %p113, %p114
      %p116 = scmp.ne.s32.totalorder %s105, %s108
      %p117 = scmp.eq.s32.totalorder %s20, 3
      %p118 = por %p116, %p117
      %p119 = scmp.ne.s32.totalorder %s108, %s109
      %p120 = scmp.eq.s32.totalorder %s20, 0
      %p121 = por %p119, %p120
      %p122 = scmp.ne.s32.totalorder %s108, %s109
      %p123 = scmp.eq.s32.totalorder %s21, 3
      %p124 = por %p122, %p123
      %p126 = scmp.ne.s32.totalorder %s109, %s125
      %p127 = scmp.eq.s32.totalorder %s21, 0
      %p128 = por %p126, %p127
      %p129 = scmp.le.s32.totalorder 1, %s15
      %p130 = scmp.lt.s32.totalorder %s15, 5
      %p131 = pnand %p129, %p130
      %p132 = pneg %p131
      // Predicated region
      $region9: #{tpu_custom_call.1} parent=5 // pred_check
        _
      $region10: #{tpu_custom_call.1} parent=5 // pred_check_branch
        %134 = sbr.rel (%p131) target = $region12
      $region11: #{tpu_custom_call.1} parent=5 // pred_region
        %s135 = ssub.s32 %s15, 1
        // Predicated region
        $region13: #{tpu_custom_call.1} parent=11 // pred_check
          %p136 = pneg %p74
        $region14: #{tpu_custom_call.1} parent=11 // pred_check_branch
          %138 = sbr.rel (%p136) target = $region16
        $region15: #{tpu_custom_call.1} parent=11 // pred_region
          _
        $region16: #{tpu_custom_call.1} parent=11 // pred_fallthru
          _
        // Predicated region
        $region17: #{tpu_custom_call.1} parent=11 // pred_check
          %p139 = pneg %p95
        $region18: #{tpu_custom_call.1} parent=11 // pred_check_branch
          %141 = sbr.rel (%p139) target = $region20
        $region19: #{tpu_custom_call.1} parent=11 // pred_region
          _
        $region20: #{tpu_custom_call.1} parent=11 // pred_fallthru
          _
      $region12: #{tpu_custom_call.1} parent=5 // pred_fallthru
        _
      %p142 = scmp.lt.s32.totalorder %s15, 4
      // Predicated region
      $region21: #{tpu_custom_call.1} parent=5 // pred_check
        %p143 = pneg %p142
      $region22: #{tpu_custom_call.1} parent=5 // pred_check_branch
        %145 = sbr.rel (%p143) target = $region24
      $region23: #{tpu_custom_call.1} parent=5 // pred_region
        // Predicated region
        $region25: #{tpu_custom_call.1} parent=23 // pred_check
          %p146 = pneg %p47
        $region26: #{tpu_custom_call.1} parent=23 // pred_check_branch
          %148 = sbr.rel (%p146) target = $region28
        $region27: #{tpu_custom_call.1} parent=23 // pred_region
          %s149 = sand.u32 %s37, 1
          %s150 = scalar_lea.sflag [#allocation7], %s149
          %s151 = sand.u32 %s37, 1
          %s152 = smul.addr %s151, 8
          %s153 = scalar_lea.vmem [#allocation6], %s152
          %s155 = ssub.s32 128, 128
          %156 = vsyncadd %s150, %s155
          %s157 = smul.addr %s22, 2
          %s158 = smul.addr %s157, 64
          %s159 = scalar_lea.hbm %s0, %s158
          %s161 = sshll.u32 %s153, 4
          %s162 = int_to_ptr.vmem [resolvable:$true] %s161
          %164 = dma.hbm_to_vmem [thread:$0]  %s159, 128, %s162, %s150
        $region28: #{tpu_custom_call.1} parent=23 // pred_fallthru
          _
      $region24: #{tpu_custom_call.1} parent=5 // pred_fallthru
        _
      %p165 = scmp.le.s32.totalorder 1, %s15
      %p166 = scmp.lt.s32.totalorder %s15, 5
      %p167 = pnand %p165, %p166
      %p168 = pneg %p167
      // Predicated region
      $region29: #{tpu_custom_call.1} parent=5 // pred_check
        _
      $region30: #{tpu_custom_call.1} parent=5 // pred_check_branch
        %170 = sbr.rel (%p167) target = $region32
      $region31: #{tpu_custom_call.1} parent=5 // pred_region
        %s171 = ssub.s32 %s15, 1
        %s172 = sand.u32 %s40, 1
        %s173 = scalar_lea.sflag [#allocation7], %s172
        %s174 = sand.u32 %s40, 1
        %s175 = smul.addr %s174, 8
        %s176 = scalar_lea.vmem [#allocation6], %s175
        // Predicated region
        $region33: #{tpu_custom_call.1} parent=31 // pred_check
          %p177 = pneg %p53
        $region34: #{tpu_custom_call.1} parent=31 // pred_check_branch
          %179 = sbr.rel (%p177) target = $region36
        $region35: #{tpu_custom_call.1} parent=31 // pred_region
          %180 = dma.done %s173, 128
        $region36: #{tpu_custom_call.1} parent=31 // pred_fallthru
          _
        %s181 = sand.u32 %s40, 1
        %s182 = scalar_lea.sflag [#allocation7], %s181
        %s183 = sand.u32 %s40, 1
        %s184 = smul.addr %s183, 8
        %s185 = scalar_lea.vmem [#allocation6], %s184
        %p186 = pneg %p53
        %p187 = pneg %p50
        %p188 = pneg %p74
        %p189 = pneg %p71
        %p190 = pneg %p95
        %p191 = pneg %p92
        %p192 = pneg %p121
        %p193 = pneg %p118
        %s194 = sand.u32 %s108, 1
        %s195 = scalar_lea.sflag [#allocation8], %s194
        %s196 = sand.u32 %s108, 1
        %s197 = smul.addr %s196, 8
        %s198 = scalar_lea.vmem [#allocation9], %s197
        %p200 = scmp.eq.s32.totalorder %s25, 0
        // Predicated region
        $region37: #{tpu_custom_call.1} parent=31 // pred_check
          %p201 = pneg %p200
        $region38: #{tpu_custom_call.1} parent=31 // pred_check_branch
          %203 = sbr.rel (%p201) target = $region40
        $region39: #{tpu_custom_call.1} parent=31 // pred_region
          %v204 = vld [vmem:[%s176] sm:$0xff]
          %v206 = vcombine.high %v204, %v204
          %v208 = vpack.c.bf16 %v204, %v204
          %v209 = vpack.c.bf16 %v206, %v206
          %v210 = vld [vmem:[%s1] sm:$0x7]
          %vm211 = vcmask 31744
          %v213 = vsel %vm211, %v210, 0
          %vm215 = vcmask 1041408
          %v217 = vsel %vm215, %v208, 0
          %v220 = vsel %vm215, %v209, 0
          %222 = vmatprep.subr.bf16.mxu0 0
          %223 = vmatpush1.bf16.msra.mxu0 0
          %224 = vmatprep.subr.bf16.mxu0 0
          %225 = vmatpush1.bf16.msra.mxu0 0
          %226 = vmatprep.subr.bf16.mxu0 0
          %227 = vmatpush1.bf16.msra.mxu0 0
          %228 = vmatprep.subr.bf16.mxu0 0
          %229 = vmatpush1.bf16.msra.mxu0 0
          %230 = vmatprep.subr.bf16.mxu0 0
          %231 = vmatpush1.bf16.msra.mxu0 0
          %232 = vmatprep.subr.bf16.mxu0 0
          %233 = vmatpush1.bf16.msra.mxu0 0
          %234 = vmatprep.subr.bf16.mxu0 0
          %235 = vmatpush1.bf16.msra.mxu0 0
          %236 = vmatprep.subr.bf16.mxu0 %v220
          %237 = vmatpush1.bf16.msra.mxu0 %v217
          %238 = vmatprep.subr.bf16.mxu0 0
          %239 = vmatpush2.bf16.msra.mxu0 0
          %240 = vmatprep.subr.bf16.mxu0 0
          %241 = vmatpush2.bf16.msra.mxu0 0
          %242 = vmatprep.subr.bf16.mxu0 0
          %243 = vmatpush2.bf16.msra.mxu0 0
          %244 = vmatprep.subr.bf16.mxu0 0
          %245 = vmatpush2.bf16.msra.mxu0 0
          %246 = vmatprep.subr.bf16.mxu0 0
          %247 = vmatpush2.bf16.msra.mxu0 0
          %248 = vmatprep.subr.bf16.mxu0 0
          %249 = vmatpush2.bf16.msra.mxu0 0
          %250 = vmatprep.subr.bf16.mxu0 0
          %251 = vmatpush2.bf16.msra.mxu0 0
          %252 = vmatprep.subr.bf16.mxu0 0
          %253 = vmatpush2.bf16.msra.mxu0 0
          %254 = vmatprep.mubr.bf16.mxu0 0
          %255 = vmatmul.mubr.bf16.gmra.mxu0 %v213
          %v256 = vpop.f32.mrf.mxu0
          %v257 = vadd.f32 0.0, %v256
          %v258 = vpop.f32.mrf.mxu0
          %v259 = vadd.f32 0.0, %v258
          %v260 = vpop.f32.mrf.mxu0
          %v261 = vpop.f32.mrf.mxu0
          %262 = vdwg.mxu0
          %v263 = vpack.c.bf16 %v257, %v257
          %v264 = vpack.c.bf16 %v259, %v259
          %v267 = vcombine.low %v263, %v264
          %v269 = vunpack.c.l.s4 1966171168
          %v270 = vunpack.c.0.s8 %v269
          %v271 = vlaneseq
          %v272 = vshrl.u32 %v271, 7
          %v273 = vsub.s32 %v270, %v272
          %v274 = vrot.slane %v267, %v273
          %v276 = vunpack.c.l.s4 1966171168
          %v277 = vunpack.c.0.s8 %v276
          %v278 = vlaneseq
          %v279 = vshrl.u32 %v278, 7
          %v280 = vsub.s32 %v277, %v279
          %v281 = vrot.slane %v274, %v280
          %283 = vst [vmem:[#allocation2] sm:$0x3] %v281
          %v284 = vcombine.high %v274, %v274
          %v286 = vunpack.c.l.s4 1966171168
          %v287 = vunpack.c.0.s8 %v286
          %v288 = vlaneseq
          %v289 = vshrl.u32 %v288, 7
          %v290 = vsub.s32 %v287, %v289
          %v291 = vrot.slane %v284, %v290
          %293 = vst [vmem:[#allocation3] sm:$0x3] %v291
          %v294 = vcombine.high %v281, %v281
          %296 = vst [vmem:[#allocation4] sm:$0x3] %v294
          %297 = vst [vmem:[#allocation5] sm:$0xf] 0.0
        $region40: #{tpu_custom_call.1} parent=31 // pred_fallthru
          _
        %s298 = smul.u32 %s25, 128
        %s299 = sshra.s32 %s298, 7
        %s300 = sand.u32 %s298, 127
        %s301 = scalar_lea.vmem [#allocation2], %s299
        %v302 = vld [vmem:[%s301] sm:$0x1]
        %v303 = vld [vmem:[#allocation3] sm:$0x3]
        %304 = vxpose.xlu0.c.b16.start [1/8] %v302, 128
        %305 = vxpose.xlu0.c.b16.cont [2/8] 0, 128
        %306 = vxpose.xlu0.c.b16.cont [3/8] 0, 128
        %307 = vxpose.xlu0.c.b16.cont [4/8] 0, 128
        %308 = vxpose.xlu0.c.b16.cont [5/8] 0, 128
        %309 = vxpose.xlu0.c.b16.cont [6/8] 0, 128
        %310 = vxpose.xlu0.c.b16.cont [7/8] 0, 128
        %311 = vxpose.xlu0.c.b16.end [8/8] 0, 128
        %v312 = vpop.trf.xlu0
        %v313 = vpop.trf.xlu0
        %v314 = vpop.trf.xlu0
        %v315 = vpop.trf.xlu0
        %v316 = vpop.trf.xlu0
        %v317 = vpop.trf.xlu0
        %v318 = vpop.trf.xlu0
        %v319 = vpop.trf.xlu0
        %v322 = vunpack.c.l.s4 1966171168
        %v323 = vunpack.c.0.s8 %v322
        %v324 = vlaneseq
        %v325 = vshrl.u32 %v324, 7
        %v326 = vsub.s32 %v323, %v325
        %v327 = vrot.slane %v303, %v326
        %v328 = vcombine.high %v327, %v327
        %v330 = vunpack.c.l.s4 1966171168
        %v331 = vunpack.c.0.s8 %v330
        %v332 = vlaneseq
        %v333 = vshrl.u32 %v332, 7
        %v334 = vsub.s32 %v331, %v333
        %v335 = vrot.slane %v327, %v334
        %v337 = vunpack.c.l.s4 1966171168
        %v338 = vunpack.c.0.s8 %v337
        %v339 = vlaneseq
        %v340 = vshrl.u32 %v339, 7
        %v341 = vsub.s32 %v338, %v340
        %v342 = vrot.slane %v328, %v341
        %vm343 = vcmask 15360
        %v345 = vsel %vm343, %v312, 0
        %v348 = vsel %vm343, %v313, 0
        %v351 = vsel %vm343, %v314, 0
        %v354 = vsel %vm343, %v315, 0
        %v357 = vsel %vm343, %v316, 0
        %v360 = vsel %vm343, %v317, 0
        %v363 = vsel %vm343, %v318, 0
        %v366 = vsel %vm343, %v319, 0
        %vm368 = vcmask 1040384
        %v370 = vsel %vm368, %v335, 0
        %v373 = vsel %vm368, %v342, 0
        %375 = vmatprep.subr.bf16.mxu0 0
        %376 = vmatpush1.bf16.msra.mxu0 0
        %377 = vmatprep.subr.bf16.mxu0 0
        %378 = vmatpush1.bf16.msra.mxu0 0
        %379 = vmatprep.subr.bf16.mxu0 0
        %380 = vmatpush1.bf16.msra.mxu0 0
        %381 = vmatprep.subr.bf16.mxu0 0
        %382 = vmatpush1.bf16.msra.mxu0 0
        %383 = vmatprep.subr.bf16.mxu0 0
        %384 = vmatpush1.bf16.msra.mxu0 0
        %385 = vmatprep.subr.bf16.mxu0 0
        %386 = vmatpush1.bf16.msra.mxu0 0
        %387 = vmatprep.subr.bf16.mxu0 0
        %388 = vmatpush1.bf16.msra.mxu0 0
        %389 = vmatprep.subr.bf16.mxu0 %v373
        %390 = vmatpush1.bf16.msra.mxu0 %v370
        %391 = vmatprep.subr.bf16.mxu0 0
        %392 = vmatpush2.bf16.msra.mxu0 0
        %393 = vmatprep.subr.bf16.mxu0 0
        %394 = vmatpush2.bf16.msra.mxu0 0
        %395 = vmatprep.subr.bf16.mxu0 0
        %396 = vmatpush2.bf16.msra.mxu0 0
        %397 = vmatprep.subr.bf16.mxu0 0
        %398 = vmatpush2.bf16.msra.mxu0 0
        %399 = vmatprep.subr.bf16.mxu0 0
        %400 = vmatpush2.bf16.msra.mxu0 0
        %401 = vmatprep.subr.bf16.mxu0 0
        %402 = vmatpush2.bf16.msra.mxu0 0
        %403 = vmatprep.subr.bf16.mxu0 0
        %404 = vmatpush2.bf16.msra.mxu0 0
        %405 = vmatprep.subr.bf16.mxu0 0
        %406 = vmatpush2.bf16.msra.mxu0 0
        %407 = vmatprep.mubr.bf16.mxu0 0
        %408 = vmatmul.mubr.bf16.gmra.mxu0 %v345
        %v409 = vpop.f32.mrf.mxu0
        %v410 = vadd.f32 0.0, %v409
        %v411 = vpop.f32.mrf.mxu0
        %v412 = vadd.f32 0.0, %v411
        %v413 = vpop.f32.mrf.mxu0
        %v414 = vadd.f32 0.0, %v413
        %v415 = vpop.f32.mrf.mxu0
        %v416 = vadd.f32 0.0, %v415
        %417 = vmatprep.mubr.bf16.mxu0 0
        %418 = vmatmul.mubr.bf16.gmra.mxu0 %v348
        %v419 = vpop.f32.mrf.mxu0
        %v420 = vadd.f32 0.0, %v419
        %v421 = vpop.f32.mrf.mxu0
        %v422 = vadd.f32 0.0, %v421
        %v423 = vpop.f32.mrf.mxu0
        %v424 = vadd.f32 0.0, %v423
        %v425 = vpop.f32.mrf.mxu0
        %v426 = vadd.f32 0.0, %v425
        %427 = vmatprep.mubr.bf16.mxu0 0
        %428 = vmatmul.mubr.bf16.gmra.mxu0 %v351
        %v429 = vpop.f32.mrf.mxu0
        %v430 = vadd.f32 0.0, %v429
        %v431 = vpop.f32.mrf.mxu0
        %v432 = vadd.f32 0.0, %v431
        %v433 = vpop.f32.mrf.mxu0
        %v434 = vadd.f32 0.0, %v433
        %v435 = vpop.f32.mrf.mxu0
        %v436 = vadd.f32 0.0, %v435
        %437 = vmatprep.mubr.bf16.mxu0 0
        %438 = vmatmul.mubr.bf16.gmra.mxu0 %v354
        %v439 = vpop.f32.mrf.mxu0
        %v440 = vadd.f32 0.0, %v439
        %v441 = vpop.f32.mrf.mxu0
        %v442 = vadd.f32 0.0, %v441
        %v443 = vpop.f32.mrf.mxu0
        %v444 = vadd.f32 0.0, %v443
        %v445 = vpop.f32.mrf.mxu0
        %v446 = vadd.f32 0.0, %v445
        %447 = vmatprep.mubr.bf16.mxu0 0
        %448 = vmatmul.mubr.bf16.gmra.mxu0 %v357
        %v449 = vpop.f32.mrf.mxu0
        %v450 = vadd.f32 0.0, %v449
        %v451 = vpop.f32.mrf.mxu0
        %v452 = vadd.f32 0.0, %v451
        %v453 = vpop.f32.mrf.mxu0
        %v454 = vadd.f32 0.0, %v453
        %v455 = vpop.f32.mrf.mxu0
        %v456 = vadd.f32 0.0, %v455
        %457 = vmatprep.mubr.bf16.mxu0 0
        %458 = vmatmul.mubr.bf16.gmra.mxu0 %v360
        %v459 = vpop.f32.mrf.mxu0
        %v460 = vadd.f32 0.0, %v459
        %v461 = vpop.f32.mrf.mxu0
        %v462 = vadd.f32 0.0, %v461
        %v463 = vpop.f32.mrf.mxu0
        %v464 = vadd.f32 0.0, %v463
        %v465 = vpop.f32.mrf.mxu0
        %v466 = vadd.f32 0.0, %v465
        %467 = vmatprep.mubr.bf16.mxu0 0
        %468 = vmatmul.mubr.bf16.gmra.mxu0 %v363
        %v469 = vpop.f32.mrf.mxu0
        %v470 = vadd.f32 0.0, %v469
        %v471 = vpop.f32.mrf.mxu0
        %v472 = vadd.f32 0.0, %v471
        %v473 = vpop.f32.mrf.mxu0
        %v474 = vadd.f32 0.0, %v473
        %v475 = vpop.f32.mrf.mxu0
        %v476 = vadd.f32 0.0, %v475
        %477 = vmatprep.mubr.bf16.mxu0 0
        %478 = vmatmul.mubr.bf16.gmra.mxu0 %v366
        %v479 = vpop.f32.mrf.mxu0
        %v480 = vadd.f32 0.0, %v479
        %v481 = vpop.f32.mrf.mxu0
        %v482 = vadd.f32 0.0, %v481
        %v483 = vpop.f32.mrf.mxu0
        %v484 = vadd.f32 0.0, %v483
        %v485 = vpop.f32.mrf.mxu0
        %v486 = vadd.f32 0.0, %v485
        %487 = vdwg.mxu0
        %v488 = vmax.f32 %v410, %v412
        %489 = vmax.xlane.f32.xlu0 %v488
        %v490 = vpop.xlane.xlu0 %489
        %v491 = vmax.f32 %v414, %v416
        %492 = vmax.xlane.f32.xlu0 %v491
        %v493 = vpop.xlane.xlu0 %492
        %v494 = vmax.f32 %v420, %v422
        %495 = vmax.xlane.f32.xlu0 %v494
        %v496 = vpop.xlane.xlu0 %495
        %v497 = vmax.f32 %v424, %v426
        %498 = vmax.xlane.f32.xlu0 %v497
        %v499 = vpop.xlane.xlu0 %498
        %v500 = vmax.f32 %v430, %v432
        %501 = vmax.xlane.f32.xlu0 %v500
        %v502 = vpop.xlane.xlu0 %501
        %v503 = vmax.f32 %v434, %v436
        %504 = vmax.xlane.f32.xlu0 %v503
        %v505 = vpop.xlane.xlu0 %504
        %v506 = vmax.f32 %v440, %v442
        %507 = vmax.xlane.f32.xlu0 %v506
        %v508 = vpop.xlane.xlu0 %507
        %v509 = vmax.f32 %v444, %v446
        %510 = vmax.xlane.f32.xlu0 %v509
        %v511 = vpop.xlane.xlu0 %510
        %v512 = vmax.f32 %v450, %v452
        %513 = vmax.xlane.f32.xlu0 %v512
        %v514 = vpop.xlane.xlu0 %513
        %v515 = vmax.f32 %v454, %v456
        %516 = vmax.xlane.f32.xlu0 %v515
        %v517 = vpop.xlane.xlu0 %516
        %v518 = vmax.f32 %v460, %v462
        %519 = vmax.xlane.f32.xlu0 %v518
        %v520 = vpop.xlane.xlu0 %519
        %v521 = vmax.f32 %v464, %v466
        %522 = vmax.xlane.f32.xlu0 %v521
        %v523 = vpop.xlane.xlu0 %522
        %v524 = vmax.f32 %v470, %v472
        %525 = vmax.xlane.f32.xlu0 %v524
        %v526 = vpop.xlane.xlu0 %525
        %v527 = vmax.f32 %v474, %v476
        %528 = vmax.xlane.f32.xlu0 %v527
        %v529 = vpop.xlane.xlu0 %528
        %v530 = vmax.f32 %v480, %v482
        %531 = vmax.xlane.f32.xlu0 %v530
        %v532 = vpop.xlane.xlu0 %531
        %v533 = vmax.f32 %v484, %v486
        %534 = vmax.xlane.f32.xlu0 %v533
        %v535 = vpop.xlane.xlu0 %534
        %v536 = vsub.f32 %v410, %v490
        %v537 = vsub.f32 %v412, %v490
        %v538 = vsub.f32 %v414, %v493
        %v539 = vsub.f32 %v416, %v493
        %v540 = vsub.f32 %v420, %v496
        %v541 = vsub.f32 %v422, %v496
        %v542 = vsub.f32 %v424, %v499
        %v543 = vsub.f32 %v426, %v499
        %v544 = vsub.f32 %v430, %v502
        %v545 = vsub.f32 %v432, %v502
        %v546 = vsub.f32 %v434, %v505
        %v547 = vsub.f32 %v436, %v505
        %v548 = vsub.f32 %v440, %v508
        %v549 = vsub.f32 %v442, %v508
        %v550 = vsub.f32 %v444, %v511
        %v551 = vsub.f32 %v446, %v511
        %v552 = vsub.f32 %v450, %v514
        %v553 = vsub.f32 %v452, %v514
        %v554 = vsub.f32 %v454, %v517
        %v555 = vsub.f32 %v456, %v517
        %v556 = vsub.f32 %v460, %v520
        %v557 = vsub.f32 %v462, %v520
        %v558 = vsub.f32 %v464, %v523
        %v559 = vsub.f32 %v466, %v523
        %v560 = vsub.f32 %v470, %v526
        %v561 = vsub.f32 %v472, %v526
        %v562 = vsub.f32 %v474, %v529
        %v563 = vsub.f32 %v476, %v529
        %v564 = vsub.f32 %v480, %v532
        %v565 = vsub.f32 %v482, %v532
        %v566 = vsub.f32 %v484, %v535
        %v567 = vsub.f32 %v486, %v535
        %v568 = vmul.f32 %v536, 1.442695
        %v569 = vpow.pop %v568
        %v570 = vmul.f32 %v537, 1.442695
        %v571 = vpow.pop %v570
        %v572 = vmul.f32 %v538, 1.442695
        %v573 = vpow.pop %v572
        %v574 = vmul.f32 %v539, 1.442695
        %v575 = vpow.pop %v574
        %v576 = vmul.f32 %v540, 1.442695
        %v577 = vpow.pop %v576
        %v578 = vmul.f32 %v541, 1.442695
        %v579 = vpow.pop %v578
        %v580 = vmul.f32 %v542, 1.442695
        %v581 = vpow.pop %v580
        %v582 = vmul.f32 %v543, 1.442695
        %v583 = vpow.pop %v582
        %v584 = vmul.f32 %v544, 1.442695
        %v585 = vpow.pop %v584
        %v586 = vmul.f32 %v545, 1.442695
        %v587 = vpow.pop %v586
        %v588 = vmul.f32 %v546, 1.442695
        %v589 = vpow.pop %v588
        %v590 = vmul.f32 %v547, 1.442695
        %v591 = vpow.pop %v590
        %v592 = vmul.f32 %v548, 1.442695
        %v593 = vpow.pop %v592
        %v594 = vmul.f32 %v549, 1.442695
        %v595 = vpow.pop %v594
        %v596 = vmul.f32 %v550, 1.442695
        %v597 = vpow.pop %v596
        %v598 = vmul.f32 %v551, 1.442695
        %v599 = vpow.pop %v598
        %v600 = vmul.f32 %v552, 1.442695
        %v601 = vpow.pop %v600
        %v602 = vmul.f32 %v553, 1.442695
        %v603 = vpow.pop %v602
        %v604 = vmul.f32 %v554, 1.442695
        %v605 = vpow.pop %v604
        %v606 = vmul.f32 %v555, 1.442695
        %v607 = vpow.pop %v606
        %v608 = vmul.f32 %v556, 1.442695
        %v609 = vpow.pop %v608
        %v610 = vmul.f32 %v557, 1.442695
        %v611 = vpow.pop %v610
        %v612 = vmul.f32 %v558, 1.442695
        %v613 = vpow.pop %v612
        %v614 = vmul.f32 %v559, 1.442695
        %v615 = vpow.pop %v614
        %v616 = vmul.f32 %v560, 1.442695
        %v617 = vpow.pop %v616
        %v618 = vmul.f32 %v561, 1.442695
        %v619 = vpow.pop %v618
        %v620 = vmul.f32 %v562, 1.442695
        %v621 = vpow.pop %v620
        %v622 = vmul.f32 %v563, 1.442695
        %v623 = vpow.pop %v622
        %v624 = vmul.f32 %v564, 1.442695
        %v625 = vpow.pop %v624
        %v626 = vmul.f32 %v565, 1.442695
        %v627 = vpow.pop %v626
        %v628 = vmul.f32 %v566, 1.442695
        %v629 = vpow.pop %v628
        %v630 = vmul.f32 %v567, 1.442695
        %v631 = vpow.pop %v630
        %v632 = vadd.f32 %v569, %v571
        %633 = vadd.xlane.f32.xlu0 %v632
        %v634 = vpop.xlane.xlu0 %633
        %v635 = vadd.f32 %v573, %v575
        %636 = vadd.xlane.f32.xlu0 %v635
        %v637 = vpop.xlane.xlu0 %636
        %v638 = vadd.f32 %v577, %v579
        %639 = vadd.xlane.f32.xlu0 %v638
        %v640 = vpop.xlane.xlu0 %639
        %v641 = vadd.f32 %v581, %v583
        %642 = vadd.xlane.f32.xlu0 %v641
        %v643 = vpop.xlane.xlu0 %642
        %v644 = vadd.f32 %v585, %v587
        %645 = vadd.xlane.f32.xlu0 %v644
        %v646 = vpop.xlane.xlu0 %645
        %v647 = vadd.f32 %v589, %v591
        %648 = vadd.xlane.f32.xlu0 %v647
        %v649 = vpop.xlane.xlu0 %648
        %v650 = vadd.f32 %v593, %v595
        %651 = vadd.xlane.f32.xlu0 %v650
        %v652 = vpop.xlane.xlu0 %651
        %v653 = vadd.f32 %v597, %v599
        %654 = vadd.xlane.f32.xlu0 %v653
        %v655 = vpop.xlane.xlu0 %654
        %v656 = vadd.f32 %v601, %v603
        %657 = vadd.xlane.f32.xlu0 %v656
        %v658 = vpop.xlane.xlu0 %657
        %v659 = vadd.f32 %v605, %v607
        %660 = vadd.xlane.f32.xlu0 %v659
        %v661 = vpop.xlane.xlu0 %660
        %v662 = vadd.f32 %v609, %v611
        %663 = vadd.xlane.f32.xlu0 %v662
        %v664 = vpop.xlane.xlu0 %663
        %v665 = vadd.f32 %v613, %v615
        %666 = vadd.xlane.f32.xlu0 %v665
        %v667 = vpop.xlane.xlu0 %666
        %v668 = vadd.f32 %v617, %v619
        %669 = vadd.xlane.f32.xlu0 %v668
        %v670 = vpop.xlane.xlu0 %669
        %v671 = vadd.f32 %v621, %v623
        %672 = vadd.xlane.f32.xlu0 %v671
        %v673 = vpop.xlane.xlu0 %672
        %v674 = vadd.f32 %v625, %v627
        %675 = vadd.xlane.f32.xlu0 %v674
        %v676 = vpop.xlane.xlu0 %675
        %v677 = vadd.f32 %v629, %v631
        %678 = vadd.xlane.f32.xlu0 %v677
        %v679 = vpop.xlane.xlu0 %678
        %v680 = vrcp.pop %v634
        %v681 = vrcp.pop %v637
        %v682 = vrcp.pop %v640
        %v683 = vrcp.pop %v643
        %v684 = vrcp.pop %v646
        %v685 = vrcp.pop %v649
        %v686 = vrcp.pop %v652
        %v687 = vrcp.pop %v655
        %v688 = vrcp.pop %v658
        %v689 = vrcp.pop %v661
        %v690 = vrcp.pop %v664
        %v691 = vrcp.pop %v667
        %v692 = vrcp.pop %v670
        %v693 = vrcp.pop %v673
        %v694 = vrcp.pop %v676
        %v695 = vrcp.pop %v679
        %v696 = vmul.f32 %v569, %v680
        %v697 = vmul.f32 %v571, %v680
        %v698 = vmul.f32 %v573, %v681
        %v699 = vmul.f32 %v575, %v681
        %v700 = vmul.f32 %v577, %v682
        %v701 = vmul.f32 %v579, %v682
        %v702 = vmul.f32 %v581, %v683
        %v703 = vmul.f32 %v583, %v683
        %v704 = vmul.f32 %v585, %v684
        %v705 = vmul.f32 %v587, %v684
        %v706 = vmul.f32 %v589, %v685
        %v707 = vmul.f32 %v591, %v685
        %v708 = vmul.f32 %v593, %v686
        %v709 = vmul.f32 %v595, %v686
        %v710 = vmul.f32 %v597, %v687
        %v711 = vmul.f32 %v599, %v687
        %v712 = vmul.f32 %v601, %v688
        %v713 = vmul.f32 %v603, %v688
        %v714 = vmul.f32 %v605, %v689
        %v715 = vmul.f32 %v607, %v689
        %v716 = vmul.f32 %v609, %v690
        %v717 = vmul.f32 %v611, %v690
        %v718 = vmul.f32 %v613, %v691
        %v719 = vmul.f32 %v615, %v691
        %v720 = vmul.f32 %v617, %v692
        %v721 = vmul.f32 %v619, %v692
        %v722 = vmul.f32 %v621, %v693
        %v723 = vmul.f32 %v623, %v693
        %v724 = vmul.f32 %v625, %v694
        %v725 = vmul.f32 %v627, %v694
        %v726 = vmul.f32 %v629, %v695
        %v727 = vmul.f32 %v631, %v695
        %v728 = vpack.c.bf16 %v698, %v696
        %v729 = vpack.c.bf16 %v699, %v697
        %v730 = vpack.c.bf16 %v702, %v700
        %v731 = vpack.c.bf16 %v703, %v701
        %v732 = vpack.c.bf16 %v706, %v704
        %v733 = vpack.c.bf16 %v707, %v705
        %v734 = vpack.c.bf16 %v710, %v708
        %v735 = vpack.c.bf16 %v711, %v709
        %v736 = vpack.c.bf16 %v714, %v712
        %v737 = vpack.c.bf16 %v715, %v713
        %v738 = vpack.c.bf16 %v718, %v716
        %v739 = vpack.c.bf16 %v719, %v717
        %v740 = vpack.c.bf16 %v722, %v720
        %v741 = vpack.c.bf16 %v723, %v721
        %v742 = vpack.c.bf16 %v726, %v724
        %v743 = vpack.c.bf16 %v727, %v725
        %s744 = scalar_lea.vmem [#allocation4], %s299
        %v745 = vld [vmem:[%s744] sm:$0x1]
        %v746 = vld [vmem:[#allocation5] sm:$0xf]
        %747 = vmatprep.subr.bf16.mxu0 %v743
        %748 = vmatpush1.bf16.msra.mxu0 %v742
        %749 = vmatprep.subr.bf16.mxu0 %v741
        %750 = vmatpush1.bf16.msra.mxu0 %v740
        %751 = vmatprep.subr.bf16.mxu0 %v739
        %752 = vmatpush1.bf16.msra.mxu0 %v738
        %753 = vmatprep.subr.bf16.mxu0 %v737
        %754 = vmatpush1.bf16.msra.mxu0 %v736
        %755 = vmatprep.subr.bf16.mxu0 %v735
        %756 = vmatpush1.bf16.msra.mxu0 %v734
        %757 = vmatprep.subr.bf16.mxu0 %v733
        %758 = vmatpush1.bf16.msra.mxu0 %v732
        %759 = vmatprep.subr.bf16.mxu0 %v731
        %760 = vmatpush1.bf16.msra.mxu0 %v730
        %761 = vmatprep.subr.bf16.mxu0 %v729
        %762 = vmatpush1.bf16.msra.mxu0 %v728
        %763 = vmatprep.subr.bf16.mxu0 0
        %764 = vmatpush2.bf16.msra.mxu0 0
        %765 = vmatprep.subr.bf16.mxu0 0
        %766 = vmatpush2.bf16.msra.mxu0 0
        %767 = vmatprep.subr.bf16.mxu0 0
        %768 = vmatpush2.bf16.msra.mxu0 0
        %769 = vmatprep.subr.bf16.mxu0 0
        %770 = vmatpush2.bf16.msra.mxu0 0
        %771 = vmatprep.subr.bf16.mxu0 0
        %772 = vmatpush2.bf16.msra.mxu0 0
        %773 = vmatprep.subr.bf16.mxu0 0
        %774 = vmatpush2.bf16.msra.mxu0 0
        %775 = vmatprep.subr.bf16.mxu0 0
        %776 = vmatpush2.bf16.msra.mxu0 0
        %777 = vmatprep.subr.bf16.mxu0 0
        %778 = vmatpush2.bf16.msra.mxu0 0
        %779 = vmatprep.mubr.bf16.mxu0 0
        %780 = vmatmul.mubr.bf16.gmra.mxu0 %v745
        %v781 = vpop.f32.mrf.mxu0
        %v782 = vadd.f32 0.0, %v781
        %v783 = vpop.f32.mrf.mxu0
        %v784 = vadd.f32 0.0, %v783
        %v785 = vpop.f32.mrf.mxu0
        %v786 = vpop.f32.mrf.mxu0
        %787 = vdwg.mxu0
        %v790 = vcombine.low %v782, %v784
        %v792 = vunpack.c.l.s4 1983009808
        %v793 = vunpack.c.0.s8 %v792
        %v794 = vlaneseq
        %v795 = vshrl.u32 %v794, 7
        %v796 = vsub.s32 %v793, %v795
        %v797 = vrot.slane %v790, %v796
        %v799 = vadd.f32 %v746, %v797
        %800 = vst [vmem:[#allocation5] sm:$0xf] %v799
        %p801 = scmp.eq.s32.totalorder %s25, 1
        // Predicated region
        $region41: #{tpu_custom_call.1} parent=31 // pred_check
          %p802 = pneg %p801
        $region42: #{tpu_custom_call.1} parent=31 // pred_check_branch
          %804 = sbr.rel (%p802) target = $region44
        $region43: #{tpu_custom_call.1} parent=31 // pred_region
          %v805 = vld [vmem:[%s2] sm:$0x3]
          %v806 = vld [vmem:[#allocation5] sm:$0xf]
          %v809 = vunpack.c.l.s4 1983009808
          %v810 = vunpack.c.0.s8 %v809
          %v811 = vlaneseq
          %v812 = vshrl.u32 %v811, 7
          %v813 = vsub.s32 %v810, %v812
          %v814 = vrot.slane %v806, %v813
          %v815 = vcombine.high %v814, %v814
          %v818 = vpack.c.bf16 %v814, %v814
          %v819 = vpack.c.bf16 %v815, %v815
          %v820 = vld [vmem:[%s176] sm:$0xff]
          %v822 = vcombine.high %v820, %v820
          %v825 = vsel %vm343, %v805, 0
          %v828 = vsel %vm368, %v818, 0
          %v831 = vsel %vm368, %v819, 0
          %833 = vmatprep.subr.bf16.mxu0 0
          %834 = vmatpush1.bf16.msra.mxu0 0
          %835 = vmatprep.subr.bf16.mxu0 0
          %836 = vmatpush1.bf16.msra.mxu0 0
          %837 = vmatprep.subr.bf16.mxu0 0
          %838 = vmatpush1.bf16.msra.mxu0 0
          %839 = vmatprep.subr.bf16.mxu0 0
          %840 = vmatpush1.bf16.msra.mxu0 0
          %841 = vmatprep.subr.bf16.mxu0 0
          %842 = vmatpush1.bf16.msra.mxu0 0
          %843 = vmatprep.subr.bf16.mxu0 0
          %844 = vmatpush1.bf16.msra.mxu0 0
          %845 = vmatprep.subr.bf16.mxu0 0
          %846 = vmatpush1.bf16.msra.mxu0 0
          %847 = vmatprep.subr.bf16.mxu0 %v831
          %848 = vmatpush1.bf16.msra.mxu0 %v828
          %849 = vmatprep.subr.bf16.mxu0 0
          %850 = vmatpush2.bf16.msra.mxu0 0
          %851 = vmatprep.subr.bf16.mxu0 0
          %852 = vmatpush2.bf16.msra.mxu0 0
          %853 = vmatprep.subr.bf16.mxu0 0
          %854 = vmatpush2.bf16.msra.mxu0 0
          %855 = vmatprep.subr.bf16.mxu0 0
          %856 = vmatpush2.bf16.msra.mxu0 0
          %857 = vmatprep.subr.bf16.mxu0 0
          %858 = vmatpush2.bf16.msra.mxu0 0
          %859 = vmatprep.subr.bf16.mxu0 0
          %860 = vmatpush2.bf16.msra.mxu0 0
          %861 = vmatprep.subr.bf16.mxu0 0
          %862 = vmatpush2.bf16.msra.mxu0 0
          %863 = vmatprep.subr.bf16.mxu0 0
          %864 = vmatpush2.bf16.msra.mxu0 0
          %865 = vmatprep.mubr.bf16.mxu0 0
          %866 = vmatmul.mubr.bf16.gmra.mxu0 %v825
          %v867 = vpop.f32.mrf.mxu0
          %v868 = vadd.f32 %v820, %v867
          %v869 = vpop.f32.mrf.mxu0
          %v870 = vadd.f32 %v822, %v869
          %v871 = vpop.f32.mrf.mxu0
          %v872 = vpop.f32.mrf.mxu0
          %873 = vdwg.mxu0
          %v876 = vcombine.low %v868, %v870
          %878 = vst [vmem:[%s198] sm:$0xff] %v876
        $region44: #{tpu_custom_call.1} parent=31 // pred_fallthru
          _
        %s879 = sand.u32 %s108, 1
        %s880 = scalar_lea.sflag [#allocation8], %s879
        %s881 = sand.u32 %s108, 1
        %s882 = smul.addr %s881, 8
        %s883 = scalar_lea.vmem [#allocation9], %s882
        // Predicated region
        $region45: #{tpu_custom_call.1} parent=31 // pred_check
          %p884 = pneg %p118
        $region46: #{tpu_custom_call.1} parent=31 // pred_check_branch
          %886 = sbr.rel (%p884) target = $region48
        $region47: #{tpu_custom_call.1} parent=31 // pred_region
          %s888 = ssub.s32 128, 128
          %889 = vsyncadd %s880, %s888
          %s890 = smul.addr %s24, 2
          %s891 = smul.addr %s890, 64
          %s892 = scalar_lea.hbm %s3, %s891
          %s894 = sshll.u32 %s883, 4
          %s895 = int_to_ptr.vmem [resolvable:$true] %s894
          %897 = dma.vmem_to_hbm [thread:$0]  %s895, 128, %s892, %s880
        $region48: #{tpu_custom_call.1} parent=31 // pred_fallthru
          _
      $region32: #{tpu_custom_call.1} parent=5 // pred_fallthru
        _
      %p898 = scmp.le.s32.totalorder 2, %s15
      // Predicated region
      $region49: #{tpu_custom_call.1} parent=5 // pred_check
        %p899 = pneg %p898
      $region50: #{tpu_custom_call.1} parent=5 // pred_check_branch
        %901 = sbr.rel (%p899) target = $region52
      $region51: #{tpu_custom_call.1} parent=5 // pred_region
        %s902 = ssub.s32 %s15, 2
        // Predicated region
        $region53: #{tpu_custom_call.1} parent=51 // pred_check
          %p903 = pneg %p124
        $region54: #{tpu_custom_call.1} parent=51 // pred_check_branch
          %905 = sbr.rel (%p903) target = $region56
        $region55: #{tpu_custom_call.1} parent=51 // pred_region
          %s906 = sand.u32 %s109, 1
          %s907 = scalar_lea.sflag [#allocation8], %s906
          %s908 = sand.u32 %s109, 1
          %s909 = smul.addr %s908, 8
          %s910 = scalar_lea.vmem [#allocation9], %s909
          %911 = dma.done %s907, 128
        $region56: #{tpu_custom_call.1} parent=51 // pred_fallthru
          _
      $region52: #{tpu_custom_call.1} parent=5 // pred_fallthru
        _
    $region6: #{tpu_custom_call.1} parent=1 // loop_footer
      %s19 = sadd.s32 1, %s15
    $region7: #{tpu_custom_call.1} parent=1 // loop_footer_branch
      %14 = sbr.rel target = $region3
    $region8: #{tpu_custom_call.1} parent=1 // loop_exit
      _
    %912 = vsyncpa [#allocation7], 1
    %s913 = scalar_lea.sflag [#allocation7], 1
    %914 = vsyncpa %s913, 1
    %915 = vsyncpa [#allocation8], 1
    %s916 = scalar_lea.sflag [#allocation8], 1
    %917 = vsyncpa %s916, 1

</llo_original>
